<compile_context>
chip_gen: v5e
topology: v5e:2x2
jax: 0.10.0
libtpu: 0.0.40
codegen_flags: <defaults>
</compile_context>

<pallas_src>
import jax
import jax.numpy as jnp
from jax.experimental import pallas as pl
from jax.experimental.pallas import tpu as pltpu


def _conv3d_sample_kernel(x_ref, bw_ref, bias_ref, o_ref, acc_ref):
    """One batch sample of the 3x3x3 'same' convolution.

    x_ref    : (1, D, Cin*H*W)         unpadded input, fused (ci, h, w) minor
    bw_ref   : (3, Cin*H*W, Cout*H*W)  banded weights, one per depth tap kd
    bias_ref : (1, Cout*H*W)
    o_ref    : (1, D, Cout*H*W)        fused (co, h, w) minor (lane-dense)
    acc_ref  : (D, Cout*H*W)           f32 scratch accumulator
    """
    d = o_ref.shape[1]
    # Center depth tap (kd=1): every output depth reads its own input depth.
    acc_ref[...] = (
        jnp.dot(x_ref[0], bw_ref[1], preferred_element_type=jnp.float32)
        + bias_ref[...])
    # Upper tap (kd=0): output depth i reads input depth i-1 (zero at i=0).
    acc_ref[1:, :] += jnp.dot(
        x_ref[0, : d - 1, :], bw_ref[0], preferred_element_type=jnp.float32)
    # Lower tap (kd=2): output depth i reads input depth i+1 (zero at i=D-1).
    acc_ref[: d - 1, :] += jnp.dot(
        x_ref[0, 1:, :], bw_ref[2], preferred_element_type=jnp.float32)
    o_ref[0] = acc_ref[...].astype(o_ref.dtype)


def fold_conv3d_params(weight, bias, H, W):
    """Fold the (kh, kw) taps + their zero padding of a 3x3x3 'same' conv into
    block-Toeplitz matrices. Run once per weight update (hoisted out of the
    per-call path).

    weight: (Cout, Cin, 3, 3, 3) -> bw: (3, Cin*H*W, Cout*H*W) with
      bw[kd][ci*H*W + h'*W + w', co*H*W + h*W + w]
        = weight[co, ci, kd, h'-h+1, w'-w+1] if both offsets are in [0, 3) else 0
    bias: (Cout,) -> (1, Cout*H*W), broadcast over (h, w).
    """
    Cout, Cin = weight.shape[0], weight.shape[1]
    K, Nc = Cin * H * W, Cout * H * W
    r = jnp.arange(K)
    ci_r, hp_r, wp_r = r // (H * W), (r // W) % H, r % W
    c = jnp.arange(Nc)
    co_c, ho_c, wo_c = c // (H * W), (c // W) % H, c % W
    kh = hp_r[:, None] - ho_c[None, :] + 1
    kw = wp_r[:, None] - wo_c[None, :] + 1
    valid = (kh >= 0) & (kh < 3) & (kw >= 0) & (kw < 3)
    kh_s, kw_s = jnp.clip(kh, 0, 2), jnp.clip(kw, 0, 2)
    wt = jnp.transpose(weight.astype(jnp.float32), (2, 1, 0, 3, 4))  # (3,Ci,Co,3,3)

    def one_band(w_kd):  # (Cin, Cout, 3, 3) -> (K, Nc)
        vals = w_kd[ci_r[:, None], co_c[None, :], kh_s, kw_s]
        return jnp.where(valid, vals, jnp.float32(0))

    bw = jax.vmap(one_band)(wt)                                     # (3, K, Nc)
    bias_f = jnp.repeat(bias.astype(jnp.float32), H * W)[None, :]   # (1, Nc)
    return bw, bias_f


def conv3d_pallas(x_ncdhw, bw, bias_f):
    """nn.Conv3d(Cin, Cout, 3, stride=1, padding=1, bias=True) forward."""
    N, Cin, D, H, W = x_ncdhw.shape
    K = Cin * H * W
    Nc = bias_f.shape[1]
    Cout = Nc // (H * W)
    assert bw.shape == (3, K, Nc), bw.shape

    # Single cheap layout pass: move the channel axis next to (h, w) so the
    # contraction axis is fused (ci, h, w). Contiguous H*W chunks move; there
    # is no padded HBM copy and no channel-minor transpose.
    xr = jnp.transpose(x_ncdhw, (0, 2, 1, 3, 4)).reshape(N, D, K)

    out_fused = pl.pallas_call(
        _conv3d_sample_kernel,
        out_shape=jax.ShapeDtypeStruct((N, D, Nc), x_ncdhw.dtype),
        grid=(N,),
        in_specs=[
            # one windowed fetch per sample (no triple read of the input)
            pl.BlockSpec((1, D, K), lambda n: (n, 0, 0)),
            # weights + bias: constant index_map -> DMA'd once, VMEM resident
            pl.BlockSpec((3, K, Nc), lambda n: (0, 0, 0)),
            pl.BlockSpec((1, Nc), lambda n: (0, 0)),
        ],
        out_specs=pl.BlockSpec((1, D, Nc), lambda n: (n, 0, 0)),
        scratch_shapes=[pltpu.VMEM((D, Nc), jnp.float32)],
        compiler_params=pltpu.CompilerParams(
            dimension_semantics=("parallel",)),   # N >= 2 keeps both v7x TCs busy
        cost_estimate=pl.CostEstimate(
            flops=2 * N * 3 * D * K * Nc,
            transcendentals=0,
            bytes_accessed=4 * (N * D * K + 3 * K * Nc + Nc + N * D * Nc)),
    )(xr, bw, bias_f)

    out = out_fused.reshape(N, D, Cout, H, W)      # split fused (co, h, w)
    return jnp.transpose(out, (0, 2, 1, 3, 4))     # back to NCDHW


def init_simple3d_params(key):
    """Deterministic parameters matching simple3D.__init__ shapes."""
    ks = jax.random.split(key, 6)

    def conv_init(kw_, kb_):
        fan_in = 5 * 3 * 3 * 3
        bound = 1.0 / jnp.sqrt(fan_in)
        w = jax.random.uniform(kw_, (5, 5, 3, 3, 3), jnp.float32, -bound, bound)
        b = jax.random.uniform(kb_, (5,), jnp.float32, -bound, bound)
        return w, b

    return {
        "conv1": conv_init(ks[0], ks[1]),
        "conv2": conv_init(ks[2], ks[3]),   # defined in __init__, unused in forward
        "conv3": conv_init(ks[4], ks[5]),   # defined in __init__, unused in forward
    }


def simple3d_forward(folded_conv1, u, v, z):
    """forward(u, v, z): slice off channel 0 of each input, apply conv1 to u."""
    u = u[:, 1:, ...]
    v = v[:, 1:, ...]   # sliced but unused, as in the PyTorch module
    z = z[:, 1:, ...]   # sliced but unused, as in the PyTorch module
    del v, z
    bw, bias_f = folded_conv1
    return conv3d_pallas(u, bw, bias_f)


if __name__ == "__main__":
    key = jax.random.PRNGKey(0)
    kp, ku, kv, kz = jax.random.split(key, 4)
    params = init_simple3d_params(kp)

    # conv1 expects 5 input channels after u[:, 1:], so C = 6 here.
    N, C, D, H, W = 2, 6, 8, 8, 8
    u = jax.random.normal(ku, (N, C, D, H, W), jnp.float32)
    v = jax.random.normal(kv, (N, C, D, H, W), jnp.float32)
    z = jax.random.normal(kz, (N, C, D, H, W), jnp.float32)

    # Fold conv1's weights into banded form ONCE (hoisted out of the forward).
    w1, b1 = params["conv1"]
    folded_conv1 = fold_conv3d_params(w1, b1, H, W)

    out = simple3d_forward(folded_conv1, u, v, z)
    out = jax.block_until_ready(out)

    # Reference check with XLA's conv (same NCDHW / OIDHW convention as PyTorch).
    ref = jax.lax.conv_general_dilated(
        u[:, 1:], w1, window_strides=(1, 1, 1),
        padding=[(1, 1), (1, 1), (1, 1)],
        dimension_numbers=("NCDHW", "OIDHW", "NCDHW"),
    ) + b1[None, :, None, None, None]

    assert out.shape == (N, 5, D, H, W), out.shape
    max_err = float(jnp.max(jnp.abs(out - ref)))
    assert jnp.allclose(out, ref, atol=2e-4, rtol=2e-4), (
        "mismatch vs reference, max abs err = %e" % max_err)
    print("KERNEL_OK")
</pallas_src>

<mosaic_0001>
module attributes {stable_mosaic.version = 11 : i64} {
  func.func @_conv3d_sample_kernel(%arg0: i32, %arg1: memref<1x8x320xf32, #tpu.memory_space<vmem>>, %arg2: memref<3x320x320xf32, #tpu.memory_space<vmem>>, %arg3: memref<1x320xf32, #tpu.memory_space<vmem>>, %arg4: memref<1x8x320xf32, #tpu.memory_space<vmem>>, %arg5: memref<8x320xf32, #tpu.memory_space<vmem>>) attributes {dimension_semantics = [#tpu.dimension_semantics<parallel>], iteration_bounds = array<i64: 2>, scalar_prefetch = 0 : i64, scratch_operands = 1 : i64, tpu.core_type = #tpu.core_type<tc>, window_params = [{transform_indices = @transform_0, window_bounds = array<i64: 1, 8, 320>}, {pipeline_mode = #tpu.pipeline_mode<synchronous>, transform_indices = @transform_1, window_bounds = array<i64: 3, 320, 320>}, {pipeline_mode = #tpu.pipeline_mode<synchronous>, transform_indices = @transform_2, window_bounds = array<i64: 1, 320>}, {transform_indices = @transform_3, window_bounds = array<i64: 1, 8, 320>}]} {
    %c0 = arith.constant 0 : index
    %c0_0 = arith.constant 0 : index
    %c0_1 = arith.constant 0 : index
    %0 = vector.load %arg1[%c0, %c0_0, %c0_1] : memref<1x8x320xf32, #tpu.memory_space<vmem>>, vector<1x8x320xf32>
    %1 = vector.shape_cast %0 : vector<1x8x320xf32> to vector<8x320xf32>
    %c1 = arith.constant 1 : index
    %c0_2 = arith.constant 0 : index
    %c0_3 = arith.constant 0 : index
    %2 = vector.load %arg2[%c1, %c0_2, %c0_3] : memref<3x320x320xf32, #tpu.memory_space<vmem>>, vector<1x320x320xf32>
    %3 = vector.shape_cast %2 : vector<1x320x320xf32> to vector<320x320xf32>
    %cst = arith.constant dense<0.000000e+00> : vector<8x320xf32>
    %4 = tpu.matmul %1, %3, %cst {dimension_numbers = #tpu.dot_dimension_numbers<[1], [0], [0], [1], [0, 0, 1, 1], [], []>} : vector<8x320xf32>, vector<320x320xf32>, vector<8x320xf32> -> vector<8x320xf32>
    %c0_4 = arith.constant 0 : index
    %c0_5 = arith.constant 0 : index
    %5 = vector.load %arg3[%c0_4, %c0_5] : memref<1x320xf32, #tpu.memory_space<vmem>>, vector<1x320xf32>
    %6 = vector.broadcast %5 : vector<1x320xf32> to vector<8x320xf32>
    %7 = arith.addf %4, %6 : vector<8x320xf32>
    %c0_6 = arith.constant 0 : index
    %c0_7 = arith.constant 0 : index
    %8 = vector.load %arg5[%c0_6, %c0_7] : memref<8x320xf32, #tpu.memory_space<vmem>>, vector<8x320xf32>
    tpu.vector_store %arg5[%c0_6, %c0_7], %7 {strides = array<i32>} : memref<8x320xf32, #tpu.memory_space<vmem>>, vector<8x320xf32>,
    %c1_8 = arith.constant 1 : index
    %c0_9 = arith.constant 0 : index
    %9 = vector.load %arg5[%c1_8, %c0_9] : memref<8x320xf32, #tpu.memory_space<vmem>>, vector<7x320xf32>
    %c0_10 = arith.constant 0 : index
    %c0_11 = arith.constant 0 : index
    %c0_12 = arith.constant 0 : index
    %10 = vector.load %arg1[%c0_10, %c0_11, %c0_12] : memref<1x8x320xf32, #tpu.memory_space<vmem>>, vector<1x7x320xf32>
    %11 = vector.shape_cast %10 : vector<1x7x320xf32> to vector<7x320xf32>
    %c0_13 = arith.constant 0 : index
    %c0_14 = arith.constant 0 : index
    %c0_15 = arith.constant 0 : index
    %12 = vector.load %arg2[%c0_13, %c0_14, %c0_15] : memref<3x320x320xf32, #tpu.memory_space<vmem>>, vector<1x320x320xf32>
    %13 = vector.shape_cast %12 : vector<1x320x320xf32> to vector<320x320xf32>
    %cst_16 = arith.constant dense<0.000000e+00> : vector<7x320xf32>
    %14 = tpu.matmul %11, %13, %cst_16 {dimension_numbers = #tpu.dot_dimension_numbers<[1], [0], [0], [1], [0, 0, 1, 1], [], []>} : vector<7x320xf32>, vector<320x320xf32>, vector<7x320xf32> -> vector<7x320xf32>
    %15 = arith.addf %9, %14 : vector<7x320xf32>
    %c1_17 = arith.constant 1 : index
    %c0_18 = arith.constant 0 : index
    %16 = vector.load %arg5[%c1_17, %c0_18] : memref<8x320xf32, #tpu.memory_space<vmem>>, vector<7x320xf32>
    tpu.vector_store %arg5[%c1_17, %c0_18], %15 {strides = array<i32>} : memref<8x320xf32, #tpu.memory_space<vmem>>, vector<7x320xf32>,
    %c0_19 = arith.constant 0 : index
    %c0_20 = arith.constant 0 : index
    %17 = vector.load %arg5[%c0_19, %c0_20] : memref<8x320xf32, #tpu.memory_space<vmem>>, vector<7x320xf32>
    %c0_21 = arith.constant 0 : index
    %c1_22 = arith.constant 1 : index
    %c0_23 = arith.constant 0 : index
    %18 = vector.load %arg1[%c0_21, %c1_22, %c0_23] : memref<1x8x320xf32, #tpu.memory_space<vmem>>, vector<1x7x320xf32>
    %19 = vector.shape_cast %18 : vector<1x7x320xf32> to vector<7x320xf32>
    %c2 = arith.constant 2 : index
    %c0_24 = arith.constant 0 : index
    %c0_25 = arith.constant 0 : index
    %20 = vector.load %arg2[%c2, %c0_24, %c0_25] : memref<3x320x320xf32, #tpu.memory_space<vmem>>, vector<1x320x320xf32>
    %21 = vector.shape_cast %20 : vector<1x320x320xf32> to vector<320x320xf32>
    %cst_26 = arith.constant dense<0.000000e+00> : vector<7x320xf32>
    %22 = tpu.matmul %19, %21, %cst_26 {dimension_numbers = #tpu.dot_dimension_numbers<[1], [0], [0], [1], [0, 0, 1, 1], [], []>} : vector<7x320xf32>, vector<320x320xf32>, vector<7x320xf32> -> vector<7x320xf32>
    %23 = arith.addf %17, %22 : vector<7x320xf32>
    %c0_27 = arith.constant 0 : index
    %c0_28 = arith.constant 0 : index
    %24 = vector.load %arg5[%c0_27, %c0_28] : memref<8x320xf32, #tpu.memory_space<vmem>>, vector<7x320xf32>
    tpu.vector_store %arg5[%c0_27, %c0_28], %23 {strides = array<i32>} : memref<8x320xf32, #tpu.memory_space<vmem>>, vector<7x320xf32>,
    %c0_29 = arith.constant 0 : index
    %c0_30 = arith.constant 0 : index
    %25 = vector.load %arg5[%c0_29, %c0_30] : memref<8x320xf32, #tpu.memory_space<vmem>>, vector<8x320xf32>
    %c0_31 = arith.constant 0 : index
    %c0_32 = arith.constant 0 : index
    %c0_33 = arith.constant 0 : index
    %26 = vector.load %arg4[%c0_31, %c0_32, %c0_33] : memref<1x8x320xf32, #tpu.memory_space<vmem>>, vector<1x8x320xf32>
    %27 = vector.shape_cast %26 : vector<1x8x320xf32> to vector<8x320xf32>
    %28 = vector.shape_cast %25 : vector<8x320xf32> to vector<1x8x320xf32>
    tpu.vector_store %arg4[%c0_31, %c0_32, %c0_33], %28 {strides = array<i32>} : memref<1x8x320xf32, #tpu.memory_space<vmem>>, vector<1x8x320xf32>,
    return
  }
  func.func @transform_0(%arg0: i32) -> (i32, i32, i32) {
    %c0_i32 = arith.constant 0 : i32
    %c0_i32_0 = arith.constant 0 : i32
    %c0_i32_1 = arith.constant 0 : i32
    return %arg0, %c0_i32, %c0_i32_0 : i32, i32, i32
  }
  func.func @transform_1(%arg0: i32) -> (i32, i32, i32) {
    %c0_i32 = arith.constant 0 : i32
    %c0_i32_0 = arith.constant 0 : i32
    %c0_i32_1 = arith.constant 0 : i32
    %c0_i32_2 = arith.constant 0 : i32
    return %c0_i32, %c0_i32_0, %c0_i32_1 : i32, i32, i32
  }
  func.func @transform_2(%arg0: i32) -> (i32, i32) {
    %c0_i32 = arith.constant 0 : i32
    %c0_i32_0 = arith.constant 0 : i32
    %c0_i32_1 = arith.constant 0 : i32
    return %c0_i32, %c0_i32_0 : i32, i32
  }
  func.func @transform_3(%arg0: i32) -> (i32, i32, i32) {
    %c0_i32 = arith.constant 0 : i32
    %c0_i32_0 = arith.constant 0 : i32
    %c0_i32_1 = arith.constant 0 : i32
    return %arg0, %c0_i32, %c0_i32_0 : i32, i32, i32
  }
}

</mosaic_0001>

<llo_original>
// kernel: tpu_custom_call.1
$region0: #{tpu_custom_call.1}
  #allocation0 [shape = 'u32[]', space=smem, size = 0x4, offset = 0x4, fixed_abs, tag = 'smem constant byte address 0x4 - core index']
  #allocation1 [shape = 'u32[72,128]{1,0:T(1,128)}', space=vmem, size = 0x9000, scoped, tag = 'internal scratch']
  #allocation2 [shape = 'f32[8,320]{1,0:T(8,128)}', space=vmem, size = 0x3000, scoped, tag = 'scratch operand']
  %s0 = inlined_call_operand.hbm [shape: f32[2,8,320], index: 0, kind: input, shape index: {}]
  %s1 = inlined_call_operand.hbm [shape: f32[3,320,320], index: 1, kind: input, shape index: {}]
  %s2 = inlined_call_operand.hbm [shape: f32[1,320], index: 2, kind: input, shape index: {}]
  %s3 = inlined_call_operand.hbm [shape: f32[2,8,320], index: 3, kind: output, shape index: {}]
  %s4 = sld [smem:[#allocation0]]
  $region57: #{tpu_custom_call.1} parent=0
    _
  %s6 = ssub.s32 1, %s4
  %s7 = scalar_select 0, %s6, %s4
  $region1: #{tpu_custom_call.1} parent=0
    #allocation3 [shape = 'u8[24576]{0}', space=vmem, size = 0x6000, scoped, tag = 'input window, operand 0']
    #allocation4 [shape = 's32[2]{0}', space=sflag, size = 0x8, scoped, tag = 'scoped memory for tpu_custom_call.1']
    #allocation5 [shape = 's32[2]{0}', space=sflag, size = 0x8, scoped, tag = 'scoped memory for tpu_custom_call.1']
    #allocation6 [shape = 'u8[1474560]{0}', space=vmem, size = 0x168000, scoped, tag = 'input window, operand 1, single buffered']
    #allocation7 [shape = 's32[1]{0}', space=sflag, size = 0x4, scoped, tag = 'scoped memory for tpu_custom_call.1']
    #allocation8 [shape = 'u8[1536]{0}', space=vmem, size = 0x800, scoped, tag = 'input window, operand 2, single buffered']
    #allocation9 [shape = 'u8[24576]{0}', space=vmem, size = 0x6000, scoped, tag = 'output window, operand 0']
    %8 = vsyncpa [#allocation4], 0
    %s9 = scalar_lea.sflag [#allocation4], 1
    %10 = vsyncpa %s9, 0
    %11 = vsyncpa [#allocation7], 0
    %12 = vsyncpa [#allocation5], 0
    %s13 = scalar_lea.sflag [#allocation5], 1
    %14 = vsyncpa %s13, 0
    loop: start=0, step=1, limit=4
    $region2: #{tpu_custom_call.1} parent=1 // loop_pre_header
      _
    $region3: #{tpu_custom_call.1} parent=1 // loop_header
      %s16 = sphi 0, %s20
      %p17 = scmp.ge.s32.totalorder %s16, 4
      %s26 = sphi 0, %s28
      %s29 = sphi 0, %s26
      %s30 = sphi 0, %s29
      %s46 = sphi 0, %s30
      %s50 = sphi 0, %s50
      %s52 = sphi 0, %s50
      %s53 = sphi 0, %s52
      %s67 = sphi 0, %s53
      %s71 = sphi 0, %s71
      %s73 = sphi 0, %s71
      %s74 = sphi 0, %s73
      %s88 = sphi 0, %s74
      %s94 = sphi 0, %s96
      %s97 = sphi 0, %s94
      %s98 = sphi 0, %s97
      %s114 = sphi 0, %s98
    $region4: #{tpu_custom_call.1} parent=1 // loop_header_branch
      %19 = sbr.rel (%p17) target = $region8
    $region5: #{tpu_custom_call.1} parent=1 // loop_body
      %s21 = ssub.s32 %s16, 1
      %s22 = ssub.s32 %s16, 2
      %s23 = sadd.s32 %s16, 1
      %s24 = ssub.s32 %s16, %s23
      %p25 = scmp.eq.s32.totalorder %s24, 0
      %s27 = sadd.s32 %s26, 1
      %s28 = scalar_select %p25, %s26, %s27
      %p31 = pneg %p25
      %p32 = scmp.eq.s32.totalorder %s16, 1
      %p33 = por %p31, %p32
      %p34 = scmp.ne.s32.totalorder %s26, %s29
      %p35 = scmp.eq.s32.totalorder %s16, 0
      %p36 = por %p34, %p35
      %p37 = scmp.ne.s32.totalorder %s26, %s29
      %p38 = scmp.eq.s32.totalorder %s21, 1
      %p39 = por %p37, %p38
      %p40 = scmp.ne.s32.totalorder %s29, %s30
      %p41 = scmp.eq.s32.totalorder %s21, 0
      %p42 = por %p40, %p41
      %p43 = scmp.ne.s32.totalorder %s29, %s30
      %p44 = scmp.eq.s32.totalorder %s22, 1
      %p45 = por %p43, %p44
      %p47 = scmp.ne.s32.totalorder %s30, %s46
      %p48 = scmp.eq.s32.totalorder %s22, 0
      %p49 = por %p47, %p48
      %s51 = sadd.s32 %s50, 1
      %p54 = scmp.eq.s32.totalorder %s16, 1
      %p55 = scmp.ne.s32.totalorder %s50, %s52
      %p56 = scmp.eq.s32.totalorder %s16, 0
      %p57 = por %p55, %p56
      %p58 = scmp.ne.s32.totalorder %s50, %s52
      %p59 = scmp.eq.s32.totalorder %s21, 1
      %p60 = por %p58, %p59
      %p61 = scmp.ne.s32.totalorder %s52, %s53
      %p62 = scmp.eq.s32.totalorder %s21, 0
      %p63 = por %p61, %p62
      %p64 = scmp.ne.s32.totalorder %s52, %s53
      %p65 = scmp.eq.s32.totalorder %s22, 1
      %p66 = por %p64, %p65
      %p68 = scmp.ne.s32.totalorder %s53, %s67
      %p69 = scmp.eq.s32.totalorder %s22, 0
      %p70 = por %p68, %p69
      %s72 = sadd.s32 %s71, 1
      %p75 = scmp.eq.s32.totalorder %s16, 1
      %p76 = scmp.ne.s32.totalorder %s71, %s73
      %p77 = scmp.eq.s32.totalorder %s16, 0
      %p78 = por %p76, %p77
      %p79 = scmp.ne.s32.totalorder %s71, %s73
      %p80 = scmp.eq.s32.totalorder %s21, 1
      %p81 = por %p79, %p80
      %p82 = scmp.ne.s32.totalorder %s73, %s74
      %p83 = scmp.eq.s32.totalorder %s21, 0
      %p84 = por %p82, %p83
      %p85 = scmp.ne.s32.totalorder %s73, %s74
      %p86 = scmp.eq.s32.totalorder %s22, 1
      %p87 = por %p85, %p86
      %p89 = scmp.ne.s32.totalorder %s74, %s88
      %p90 = scmp.eq.s32.totalorder %s22, 0
      %p91 = por %p89, %p90
      %s92 = ssub.s32 %s16, %s23
      %p93 = scmp.eq.s32.totalorder %s92, 0
      %s95 = sadd.s32 %s94, 1
      %s96 = scalar_select %p93, %s94, %s95
      %p99 = pneg %p93
      %p100 = scmp.eq.s32.totalorder %s16, 1
      %p101 = por %p99, %p100
      %p102 = scmp.ne.s32.totalorder %s94, %s97
      %p103 = scmp.eq.s32.totalorder %s16, 0
      %p104 = por %p102, %p103
      %p105 = scmp.ne.s32.totalorder %s94, %s97
      %p106 = scmp.eq.s32.totalorder %s21, 1
      %p107 = por %p105, %p106
      %p108 = scmp.ne.s32.totalorder %s97, %s98
      %p109 = scmp.eq.s32.totalorder %s21, 0
      %p110 = por %p108, %p109
      %p111 = scmp.ne.s32.totalorder %s97, %s98
      %p112 = scmp.eq.s32.totalorder %s22, 1
      %p113 = por %p111, %p112
      %p115 = scmp.ne.s32.totalorder %s98, %s114
      %p116 = scmp.eq.s32.totalorder %s22, 0
      %p117 = por %p115, %p116
      %p118 = scmp.le.s32.totalorder 1, %s16
      %p119 = scmp.lt.s32.totalorder %s16, 3
      %p120 = pnand %p118, %p119
      %p121 = pneg %p120
      // Predicated region
      $region9: #{tpu_custom_call.1} parent=5 // pred_check
        _
      $region10: #{tpu_custom_call.1} parent=5 // pred_check_branch
        %123 = sbr.rel (%p120) target = $region12
      $region11: #{tpu_custom_call.1} parent=5 // pred_region
        %s124 = ssub.s32 %s16, 1
        // Predicated region
        $region13: #{tpu_custom_call.1} parent=11 // pred_check
          %p125 = pneg %p63
        $region14: #{tpu_custom_call.1} parent=11 // pred_check_branch
          %127 = sbr.rel (%p125) target = $region16
        $region15: #{tpu_custom_call.1} parent=11 // pred_region
          %129 = vsyncadd [#allocation7], 0
          %s130 = sshll.u32 %s1, 4
          %s131 = int_to_ptr.hbm [resolvable:$true] %s130
          %s132 = sshll.u32 [#allocation6], 4
          %s133 = int_to_ptr.vmem [resolvable:$true] %s132
          %138 = dma.hbm_to_vmem [thread:$0]  %s131, 46080, %s133, [#allocation7], 384, 384, 24
        $region16: #{tpu_custom_call.1} parent=11 // pred_fallthru
          _
        // Predicated region
        $region17: #{tpu_custom_call.1} parent=11 // pred_check
          %p139 = pneg %p84
        $region18: #{tpu_custom_call.1} parent=11 // pred_check_branch
          %141 = sbr.rel (%p139) target = $region20
        $region19: #{tpu_custom_call.1} parent=11 // pred_region
          %143 = vsyncadd [#allocation7], 0
          %s145 = sshll.u32 %s2, 4
          %s146 = int_to_ptr.hbm [resolvable:$true] %s145
          %s147 = sshll.u32 [#allocation8], 4
          %s148 = int_to_ptr.vmem [resolvable:$true] %s147
          %150 = dma.hbm_to_vmem [thread:$0]  %s146, 48, %s148, [#allocation7]
        $region20: #{tpu_custom_call.1} parent=11 // pred_fallthru
          _
      $region12: #{tpu_custom_call.1} parent=5 // pred_fallthru
        _
      %p151 = scmp.lt.s32.totalorder %s16, 2
      // Predicated region
      $region21: #{tpu_custom_call.1} parent=5 // pred_check
        %p152 = pneg %p151
      $region22: #{tpu_custom_call.1} parent=5 // pred_check_branch
        %154 = sbr.rel (%p152) target = $region24
      $region23: #{tpu_custom_call.1} parent=5 // pred_region
        // Predicated region
        $region25: #{tpu_custom_call.1} parent=23 // pred_check
          %p155 = pneg %p36
        $region26: #{tpu_custom_call.1} parent=23 // pred_check_branch
          %157 = sbr.rel (%p155) target = $region28
        $region27: #{tpu_custom_call.1} parent=23 // pred_region
          %s158 = sand.u32 %s26, 1
          %s159 = scalar_lea.sflag [#allocation4], %s158
          %s160 = sand.u32 %s26, 1
          %s161 = smul.addr %s160, 24
          %s162 = scalar_lea.vmem [#allocation3], %s161
          %164 = vsyncadd %s159, 0
          %s165 = smul.addr %s16, 3
          %s166 = smul.addr %s165, 8
          %s167 = scalar_lea.hbm %s0, %s166
          %s169 = sshll.u32 %s167, 4
          %s170 = int_to_ptr.hbm [resolvable:$true] %s169
          %s171 = sshll.u32 %s162, 4
          %s172 = int_to_ptr.vmem [resolvable:$true] %s171
          %174 = dma.hbm_to_vmem [thread:$0]  %s170, 384, %s172, %s159
        $region28: #{tpu_custom_call.1} parent=23 // pred_fallthru
          _
      $region24: #{tpu_custom_call.1} parent=5 // pred_fallthru
        _
      %p175 = scmp.le.s32.totalorder 1, %s16
      %p176 = scmp.lt.s32.totalorder %s16, 3
      %p177 = pnand %p175, %p176
      %p178 = pneg %p177
      // Predicated region
      $region29: #{tpu_custom_call.1} parent=5 // pred_check
        _
      $region30: #{tpu_custom_call.1} parent=5 // pred_check_branch
        %180 = sbr.rel (%p177) target = $region32
      $region31: #{tpu_custom_call.1} parent=5 // pred_region
        %s181 = ssub.s32 %s16, 1
        %s182 = sand.u32 %s29, 1
        %s183 = scalar_lea.sflag [#allocation4], %s182
        %s184 = sand.u32 %s29, 1
        %s185 = smul.addr %s184, 24
        %s186 = scalar_lea.vmem [#allocation3], %s185
        // Predicated region
        $region33: #{tpu_custom_call.1} parent=31 // pred_check
          %p187 = pneg %p42
        $region34: #{tpu_custom_call.1} parent=31 // pred_check_branch
          %189 = sbr.rel (%p187) target = $region36
        $region35: #{tpu_custom_call.1} parent=31 // pred_region
          %191 = dma.done %s183, 384
        $region36: #{tpu_custom_call.1} parent=31 // pred_fallthru
          _
        // Predicated region
        $region37: #{tpu_custom_call.1} parent=31 // pred_check
          %p192 = pneg %p63
        $region38: #{tpu_custom_call.1} parent=31 // pred_check_branch
          %194 = sbr.rel (%p192) target = $region40
        $region39: #{tpu_custom_call.1} parent=31 // pred_region
          %196 = dma.done [#allocation7], 46080
        $region40: #{tpu_custom_call.1} parent=31 // pred_fallthru
          _
        // Predicated region
        $region41: #{tpu_custom_call.1} parent=31 // pred_check
          %p197 = pneg %p84
        $region42: #{tpu_custom_call.1} parent=31 // pred_check_branch
          %199 = sbr.rel (%p197) target = $region44
        $region43: #{tpu_custom_call.1} parent=31 // pred_region
          %201 = dma.done [#allocation7], 48
        $region44: #{tpu_custom_call.1} parent=31 // pred_fallthru
          _
        %s202 = sand.u32 %s29, 1
        %s203 = scalar_lea.sflag [#allocation4], %s202
        %s204 = sand.u32 %s29, 1
        %s205 = smul.addr %s204, 24
        %s206 = scalar_lea.vmem [#allocation3], %s205
        %p207 = pneg %p42
        %p208 = pneg %p39
        %p209 = pneg %p63
        %p210 = pneg %p60
        %p211 = pneg %p84
        %p212 = pneg %p81
        %p213 = pneg %p110
        %p214 = pneg %p107
        %s215 = sand.u32 %s97, 1
        %s216 = scalar_lea.sflag [#allocation5], %s215
        %s217 = sand.u32 %s97, 1
        %s218 = smul.addr %s217, 24
        %s219 = scalar_lea.vmem [#allocation9], %s218
        %v220 = vld [vmem:[%s186] sm:$0xff]
        %v221 = vld [vmem:[%s186 + $0x8] sm:$0xff]
        %v222 = vld [vmem:[%s186 + $0x10] sm:$0xff]
        %s223 = scalar_lea.vmem [#allocation6], 960
        %v224 = vld [vmem:[%s223] sm:$0xff]
        %v225 = vld [vmem:[%s223 + $0x8] sm:$0xff]
        %v226 = vld [vmem:[%s223 + $0x10] sm:$0xff]
        %v227 = vld [vmem:[%s223 + $0x18] sm:$0xff]
        %v228 = vld [vmem:[%s223 + $0x20] sm:$0xff]
        %v229 = vld [vmem:[%s223 + $0x28] sm:$0xff]
        %v230 = vld [vmem:[%s223 + $0x30] sm:$0xff]
        %v231 = vld [vmem:[%s223 + $0x38] sm:$0xff]
        %v232 = vld [vmem:[%s223 + $0x40] sm:$0xff]
        %v233 = vld [vmem:[%s223 + $0x48] sm:$0xff]
        %v234 = vld [vmem:[%s223 + $0x50] sm:$0xff]
        %v235 = vld [vmem:[%s223 + $0x58] sm:$0xff]
        %v236 = vld [vmem:[%s223 + $0x60] sm:$0xff]
        %v237 = vld [vmem:[%s223 + $0x68] sm:$0xff]
        %v238 = vld [vmem:[%s223 + $0x70] sm:$0xff]
        %v239 = vld [vmem:[%s223 + $0x78] sm:$0xff]
        %v240 = vld [vmem:[%s223 + $0x80] sm:$0xff]
        %v241 = vld [vmem:[%s223 + $0x88] sm:$0xff]
        %v242 = vld [vmem:[%s223 + $0x90] sm:$0xff]
        %v243 = vld [vmem:[%s223 + $0x98] sm:$0xff]
        %v244 = vld [vmem:[%s223 + $0xa0] sm:$0xff]
        %v245 = vld [vmem:[%s223 + $0xa8] sm:$0xff]
        %v246 = vld [vmem:[%s223 + $0xb0] sm:$0xff]
        %v247 = vld [vmem:[%s223 + $0xb8] sm:$0xff]
        %v248 = vld [vmem:[%s223 + $0xc0] sm:$0xff]
        %v249 = vld [vmem:[%s223 + $0xc8] sm:$0xff]
        %v250 = vld [vmem:[%s223 + $0xd0] sm:$0xff]
        %v251 = vld [vmem:[%s223 + $0xd8] sm:$0xff]
        %v252 = vld [vmem:[%s223 + $0xe0] sm:$0xff]
        %v253 = vld [vmem:[%s223 + $0xe8] sm:$0xff]
        %v254 = vld [vmem:[%s223 + $0xf0] sm:$0xff]
        %v255 = vld [vmem:[%s223 + $0xf8] sm:$0xff]
        %v256 = vld [vmem:[%s223 + $0x100] sm:$0xff]
        %v257 = vld [vmem:[%s223 + $0x108] sm:$0xff]
        %v258 = vld [vmem:[%s223 + $0x110] sm:$0xff]
        %v259 = vld [vmem:[%s223 + $0x118] sm:$0xff]
        %v260 = vld [vmem:[%s223 + $0x120] sm:$0xff]
        %v261 = vld [vmem:[%s223 + $0x128] sm:$0xff]
        %v262 = vld [vmem:[%s223 + $0x130] sm:$0xff]
        %v263 = vld [vmem:[%s223 + $0x138] sm:$0xff]
        %v264 = vld [vmem:[%s223 + $0x140] sm:$0xff]
        %v265 = vld [vmem:[%s223 + $0x148] sm:$0xff]
        %v266 = vld [vmem:[%s223 + $0x150] sm:$0xff]
        %v267 = vld [vmem:[%s223 + $0x158] sm:$0xff]
        %v268 = vld [vmem:[%s223 + $0x160] sm:$0xff]
        %v269 = vld [vmem:[%s223 + $0x168] sm:$0xff]
        %v270 = vld [vmem:[%s223 + $0x170] sm:$0xff]
        %v271 = vld [vmem:[%s223 + $0x178] sm:$0xff]
        %v272 = vld [vmem:[%s223 + $0x180] sm:$0xff]
        %v273 = vld [vmem:[%s223 + $0x188] sm:$0xff]
        %v274 = vld [vmem:[%s223 + $0x190] sm:$0xff]
        %v275 = vld [vmem:[%s223 + $0x198] sm:$0xff]
        %v276 = vld [vmem:[%s223 + $0x1a0] sm:$0xff]
        %v277 = vld [vmem:[%s223 + $0x1a8] sm:$0xff]
        %v278 = vld [vmem:[%s223 + $0x1b0] sm:$0xff]
        %v279 = vld [vmem:[%s223 + $0x1b8] sm:$0xff]
        %v280 = vld [vmem:[%s223 + $0x1c0] sm:$0xff]
        %v281 = vld [vmem:[%s223 + $0x1c8] sm:$0xff]
        %v282 = vld [vmem:[%s223 + $0x1d0] sm:$0xff]
        %v283 = vld [vmem:[%s223 + $0x1d8] sm:$0xff]
        %v284 = vld [vmem:[%s223 + $0x1e0] sm:$0xff]
        %v285 = vld [vmem:[%s223 + $0x1e8] sm:$0xff]
        %v286 = vld [vmem:[%s223 + $0x1f0] sm:$0xff]
        %v287 = vld [vmem:[%s223 + $0x1f8] sm:$0xff]
        %v288 = vld [vmem:[%s223 + $0x200] sm:$0xff]
        %v289 = vld [vmem:[%s223 + $0x208] sm:$0xff]
        %v290 = vld [vmem:[%s223 + $0x210] sm:$0xff]
        %v291 = vld [vmem:[%s223 + $0x218] sm:$0xff]
        %v292 = vld [vmem:[%s223 + $0x220] sm:$0xff]
        %v293 = vld [vmem:[%s223 + $0x228] sm:$0xff]
        %v294 = vld [vmem:[%s223 + $0x230] sm:$0xff]
        %v295 = vld [vmem:[%s223 + $0x238] sm:$0xff]
        %v296 = vld [vmem:[%s223 + $0x240] sm:$0xff]
        %v297 = vld [vmem:[%s223 + $0x248] sm:$0xff]
        %v298 = vld [vmem:[%s223 + $0x250] sm:$0xff]
        %v299 = vld [vmem:[%s223 + $0x258] sm:$0xff]
        %v300 = vld [vmem:[%s223 + $0x260] sm:$0xff]
        %v301 = vld [vmem:[%s223 + $0x268] sm:$0xff]
        %v302 = vld [vmem:[%s223 + $0x270] sm:$0xff]
        %v303 = vld [vmem:[%s223 + $0x278] sm:$0xff]
        %v304 = vld [vmem:[%s223 + $0x280] sm:$0xff]
        %v305 = vld [vmem:[%s223 + $0x288] sm:$0xff]
        %v306 = vld [vmem:[%s223 + $0x290] sm:$0xff]
        %v307 = vld [vmem:[%s223 + $0x298] sm:$0xff]
        %v308 = vld [vmem:[%s223 + $0x2a0] sm:$0xff]
        %v309 = vld [vmem:[%s223 + $0x2a8] sm:$0xff]
        %v310 = vld [vmem:[%s223 + $0x2b0] sm:$0xff]
        %v311 = vld [vmem:[%s223 + $0x2b8] sm:$0xff]
        %v312 = vld [vmem:[%s223 + $0x2c0] sm:$0xff]
        %v313 = vld [vmem:[%s223 + $0x2c8] sm:$0xff]
        %v314 = vld [vmem:[%s223 + $0x2d0] sm:$0xff]
        %v315 = vld [vmem:[%s223 + $0x2d8] sm:$0xff]
        %v316 = vld [vmem:[%s223 + $0x2e0] sm:$0xff]
        %v317 = vld [vmem:[%s223 + $0x2e8] sm:$0xff]
        %v318 = vld [vmem:[%s223 + $0x2f0] sm:$0xff]
        %v319 = vld [vmem:[%s223 + $0x2f8] sm:$0xff]
        %v320 = vld [vmem:[%s223 + $0x300] sm:$0xff]
        %v321 = vld [vmem:[%s223 + $0x308] sm:$0xff]
        %v322 = vld [vmem:[%s223 + $0x310] sm:$0xff]
        %v323 = vld [vmem:[%s223 + $0x318] sm:$0xff]
        %v324 = vld [vmem:[%s223 + $0x320] sm:$0xff]
        %v325 = vld [vmem:[%s223 + $0x328] sm:$0xff]
        %v326 = vld [vmem:[%s223 + $0x330] sm:$0xff]
        %v327 = vld [vmem:[%s223 + $0x338] sm:$0xff]
        %v328 = vld [vmem:[%s223 + $0x340] sm:$0xff]
        %v329 = vld [vmem:[%s223 + $0x348] sm:$0xff]
        %v330 = vld [vmem:[%s223 + $0x350] sm:$0xff]
        %v331 = vld [vmem:[%s223 + $0x358] sm:$0xff]
        %v332 = vld [vmem:[%s223 + $0x360] sm:$0xff]
        %v333 = vld [vmem:[%s223 + $0x368] sm:$0xff]
        %v334 = vld [vmem:[%s223 + $0x370] sm:$0xff]
        %v335 = vld [vmem:[%s223 + $0x378] sm:$0xff]
        %v336 = vld [vmem:[%s223 + $0x380] sm:$0xff]
        %v337 = vld [vmem:[%s223 + $0x388] sm:$0xff]
        %v338 = vld [vmem:[%s223 + $0x390] sm:$0xff]
        %v339 = vld [vmem:[%s223 + $0x398] sm:$0xff]
        %v340 = vld [vmem:[%s223 + $0x3a0] sm:$0xff]
        %v341 = vld [vmem:[%s223 + $0x3a8] sm:$0xff]
        %v342 = vld [vmem:[%s223 + $0x3b0] sm:$0xff]
        %v343 = vld [vmem:[%s223 + $0x3b8] sm:$0xff]
        %v344 = vld [vmem:[#allocation8] sm:$0x7]
        %v346 = vperm.slane %v344, 0
        %v347 = vperm.slane %v344, 1
        %v348 = vperm.slane %v344, 2
        %vm352 = vcmask 523264
        %v354 = vsel %vm352, %v222, 0
        %356 = vmatpush.msra.mxu0 %v269
        %357 = vmatpush.msra.mxu0 %v266
        %358 = vmatpush.msra.mxu0 %v263
        %359 = vmatpush.msra.mxu0 %v260
        %360 = vmatpush.msra.mxu0 %v257
        %361 = vmatpush.msra.mxu0 %v254
        %362 = vmatpush.msra.mxu0 %v251
        %363 = vmatpush.msra.mxu0 %v248
        %364 = vmatpush.msra.mxu0 %v245
        %365 = vmatpush.msra.mxu0 %v242
        %366 = vmatpush.msra.mxu0 %v239
        %367 = vmatpush.msra.mxu0 %v236
        %368 = vmatpush.msra.mxu0 %v233
        %369 = vmatpush.msra.mxu0 %v230
        %370 = vmatpush.msra.mxu0 %v227
        %371 = vmatpush.msra.mxu0 %v224
        %372 = vmatmul.f32.gmra.mxu0 %v220
        %v373 = vpop.f32.mrf.mxu0
        %v374 = vadd.f32 %v346, %v373
        %375 = vdwg.mxu0
        %376 = vmatpush.msra.mxu0 %v317
        %377 = vmatpush.msra.mxu0 %v314
        %378 = vmatpush.msra.mxu0 %v311
        %379 = vmatpush.msra.mxu0 %v308
        %380 = vmatpush.msra.mxu0 %v305
        %381 = vmatpush.msra.mxu0 %v302
        %382 = vmatpush.msra.mxu0 %v299
        %383 = vmatpush.msra.mxu0 %v296
        %384 = vmatpush.msra.mxu0 %v293
        %385 = vmatpush.msra.mxu0 %v290
        %386 = vmatpush.msra.mxu0 %v287
        %387 = vmatpush.msra.mxu0 %v284
        %388 = vmatpush.msra.mxu0 %v281
        %389 = vmatpush.msra.mxu0 %v278
        %390 = vmatpush.msra.mxu0 %v275
        %391 = vmatpush.msra.mxu0 %v272
        %392 = vmatmul.f32.gmra.mxu0 %v221
        %v393 = vpop.f32.mrf.mxu0
        %v394 = vadd.f32 %v374, %v393
        %395 = vdwg.mxu0
        %396 = vmatpush.msra.mxu0 0.0
        %397 = vmatpush.msra.mxu0 0.0
        %398 = vmatpush.msra.mxu0 0.0
        %399 = vmatpush.msra.mxu0 0.0
        %400 = vmatpush.msra.mxu0 0.0
        %401 = vmatpush.msra.mxu0 0.0
        %402 = vmatpush.msra.mxu0 0.0
        %403 = vmatpush.msra.mxu0 0.0
        %404 = vmatpush.msra.mxu0 %v341
        %405 = vmatpush.msra.mxu0 %v338
        %406 = vmatpush.msra.mxu0 %v335
        %407 = vmatpush.msra.mxu0 %v332
        %408 = vmatpush.msra.mxu0 %v329
        %409 = vmatpush.msra.mxu0 %v326
        %410 = vmatpush.msra.mxu0 %v323
        %411 = vmatpush.msra.mxu0 %v320
        %412 = vmatmul.f32.gmra.mxu0 %v354
        %v413 = vpop.f32.mrf.mxu0
        %v414 = vadd.f32 %v394, %v413
        %415 = vdwg.mxu0
        %416 = vmatpush.msra.mxu0 %v270
        %417 = vmatpush.msra.mxu0 %v267
        %418 = vmatpush.msra.mxu0 %v264
        %419 = vmatpush.msra.mxu0 %v261
        %420 = vmatpush.msra.mxu0 %v258
        %421 = vmatpush.msra.mxu0 %v255
        %422 = vmatpush.msra.mxu0 %v252
        %423 = vmatpush.msra.mxu0 %v249
        %424 = vmatpush.msra.mxu0 %v246
        %425 = vmatpush.msra.mxu0 %v243
        %426 = vmatpush.msra.mxu0 %v240
        %427 = vmatpush.msra.mxu0 %v237
        %428 = vmatpush.msra.mxu0 %v234
        %429 = vmatpush.msra.mxu0 %v231
        %430 = vmatpush.msra.mxu0 %v228
        %431 = vmatpush.msra.mxu0 %v225
        %432 = vmatmul.f32.gmra.mxu0 %v220
        %v433 = vpop.f32.mrf.mxu0
        %v434 = vadd.f32 %v347, %v433
        %435 = vdwg.mxu0
        %436 = vmatpush.msra.mxu0 %v318
        %437 = vmatpush.msra.mxu0 %v315
        %438 = vmatpush.msra.mxu0 %v312
        %439 = vmatpush.msra.mxu0 %v309
        %440 = vmatpush.msra.mxu0 %v306
        %441 = vmatpush.msra.mxu0 %v303
        %442 = vmatpush.msra.mxu0 %v300
        %443 = vmatpush.msra.mxu0 %v297
        %444 = vmatpush.msra.mxu0 %v294
        %445 = vmatpush.msra.mxu0 %v291
        %446 = vmatpush.msra.mxu0 %v288
        %447 = vmatpush.msra.mxu0 %v285
        %448 = vmatpush.msra.mxu0 %v282
        %449 = vmatpush.msra.mxu0 %v279
        %450 = vmatpush.msra.mxu0 %v276
        %451 = vmatpush.msra.mxu0 %v273
        %452 = vmatmul.f32.gmra.mxu0 %v221
        %v453 = vpop.f32.mrf.mxu0
        %v454 = vadd.f32 %v434, %v453
        %455 = vdwg.mxu0
        %456 = vmatpush.msra.mxu0 0.0
        %457 = vmatpush.msra.mxu0 0.0
        %458 = vmatpush.msra.mxu0 0.0
        %459 = vmatpush.msra.mxu0 0.0
        %460 = vmatpush.msra.mxu0 0.0
        %461 = vmatpush.msra.mxu0 0.0
        %462 = vmatpush.msra.mxu0 0.0
        %463 = vmatpush.msra.mxu0 0.0
        %464 = vmatpush.msra.mxu0 %v342
        %465 = vmatpush.msra.mxu0 %v339
        %466 = vmatpush.msra.mxu0 %v336
        %467 = vmatpush.msra.mxu0 %v333
        %468 = vmatpush.msra.mxu0 %v330
        %469 = vmatpush.msra.mxu0 %v327
        %470 = vmatpush.msra.mxu0 %v324
        %471 = vmatpush.msra.mxu0 %v321
        %472 = vmatmul.f32.gmra.mxu0 %v354
        %v473 = vpop.f32.mrf.mxu0
        %v474 = vadd.f32 %v454, %v473
        %475 = vdwg.mxu0
        %476 = vmatpush.msra.mxu0 %v271
        %477 = vmatpush.msra.mxu0 %v268
        %478 = vmatpush.msra.mxu0 %v265
        %479 = vmatpush.msra.mxu0 %v262
        %480 = vmatpush.msra.mxu0 %v259
        %481 = vmatpush.msra.mxu0 %v256
        %482 = vmatpush.msra.mxu0 %v253
        %483 = vmatpush.msra.mxu0 %v250
        %484 = vmatpush.msra.mxu0 %v247
        %485 = vmatpush.msra.mxu0 %v244
        %486 = vmatpush.msra.mxu0 %v241
        %487 = vmatpush.msra.mxu0 %v238
        %488 = vmatpush.msra.mxu0 %v235
        %489 = vmatpush.msra.mxu0 %v232
        %490 = vmatpush.msra.mxu0 %v229
        %491 = vmatpush.msra.mxu0 %v226
        %492 = vmatmul.f32.gmra.mxu0 %v220
        %v493 = vpop.f32.mrf.mxu0
        %v494 = vadd.f32 %v348, %v493
        %495 = vdwg.mxu0
        %496 = vmatpush.msra.mxu0 %v319
        %497 = vmatpush.msra.mxu0 %v316
        %498 = vmatpush.msra.mxu0 %v313
        %499 = vmatpush.msra.mxu0 %v310
        %500 = vmatpush.msra.mxu0 %v307
        %501 = vmatpush.msra.mxu0 %v304
        %502 = vmatpush.msra.mxu0 %v301
        %503 = vmatpush.msra.mxu0 %v298
        %504 = vmatpush.msra.mxu0 %v295
        %505 = vmatpush.msra.mxu0 %v292
        %506 = vmatpush.msra.mxu0 %v289
        %507 = vmatpush.msra.mxu0 %v286
        %508 = vmatpush.msra.mxu0 %v283
        %509 = vmatpush.msra.mxu0 %v280
        %510 = vmatpush.msra.mxu0 %v277
        %511 = vmatpush.msra.mxu0 %v274
        %512 = vmatmul.f32.gmra.mxu0 %v221
        %v513 = vpop.f32.mrf.mxu0
        %v514 = vadd.f32 %v494, %v513
        %515 = vdwg.mxu0
        %516 = vmatpush.msra.mxu0 0.0
        %517 = vmatpush.msra.mxu0 0.0
        %518 = vmatpush.msra.mxu0 0.0
        %519 = vmatpush.msra.mxu0 0.0
        %520 = vmatpush.msra.mxu0 0.0
        %521 = vmatpush.msra.mxu0 0.0
        %522 = vmatpush.msra.mxu0 0.0
        %523 = vmatpush.msra.mxu0 0.0
        %524 = vmatpush.msra.mxu0 %v343
        %525 = vmatpush.msra.mxu0 %v340
        %526 = vmatpush.msra.mxu0 %v337
        %527 = vmatpush.msra.mxu0 %v334
        %528 = vmatpush.msra.mxu0 %v331
        %529 = vmatpush.msra.mxu0 %v328
        %530 = vmatpush.msra.mxu0 %v325
        %531 = vmatpush.msra.mxu0 %v322
        %532 = vmatmul.f32.gmra.mxu0 %v354
        %v533 = vpop.f32.mrf.mxu0
        %v534 = vadd.f32 %v514, %v533
        %535 = vdwg.mxu0
        %536 = vst [vmem:[#allocation2] sm:$0xff] %v414
        %537 = vst [vmem:[#allocation2 + $0x8] sm:$0xff] %v474
        %538 = vst.msk [vmem:[#allocation2 + $0x10] sm:$0xff] %vm352, %v534
        %v539 = vld [vmem:[#allocation2] sm:$0xfe]
        %v540 = vld [vmem:[#allocation2 + $0x8] sm:$0xfe]
        %v541 = vld [vmem:[#allocation2 + $0x10] sm:$0xfe]
        %v542 = vld [vmem:[%s186] sm:$0x7f]
        %v543 = vld [vmem:[%s186 + $0x8] sm:$0x7f]
        %v544 = vld [vmem:[%s186 + $0x10] sm:$0x7f]
        %v545 = vld [vmem:[#allocation6] sm:$0xff]
        %v546 = vld [vmem:[#allocation6 + $0x8] sm:$0xff]
        %v547 = vld [vmem:[#allocation6 + $0x10] sm:$0xff]
        %v548 = vld [vmem:[#allocation6 + $0x18] sm:$0xff]
        %v549 = vld [vmem:[#allocation6 + $0x20] sm:$0xff]
        %v550 = vld [vmem:[#allocation6 + $0x28] sm:$0xff]
        %v551 = vld [vmem:[#allocation6 + $0x30] sm:$0xff]
        %v552 = vld [vmem:[#allocation6 + $0x38] sm:$0xff]
        %v553 = vld [vmem:[#allocation6 + $0x40] sm:$0xff]
        %v554 = vld [vmem:[#allocation6 + $0x48] sm:$0xff]
        %v555 = vld [vmem:[#allocation6 + $0x50] sm:$0xff]
        %v556 = vld [vmem:[#allocation6 + $0x58] sm:$0xff]
        %v557 = vld [vmem:[#allocation6 + $0x60] sm:$0xff]
        %v558 = vld [vmem:[#allocation6 + $0x68] sm:$0xff]
        %v559 = vld [vmem:[#allocation6 + $0x70] sm:$0xff]
        %v560 = vld [vmem:[#allocation6 + $0x78] sm:$0xff]
        %v561 = vld [vmem:[#allocation6 + $0x80] sm:$0xff]
        %v562 = vld [vmem:[#allocation6 + $0x88] sm:$0xff]
        %v563 = vld [vmem:[#allocation6 + $0x90] sm:$0xff]
        %v564 = vld [vmem:[#allocation6 + $0x98] sm:$0xff]
        %v565 = vld [vmem:[#allocation6 + $0xa0] sm:$0xff]
        %v566 = vld [vmem:[#allocation6 + $0xa8] sm:$0xff]
        %v567 = vld [vmem:[#allocation6 + $0xb0] sm:$0xff]
        %v568 = vld [vmem:[#allocation6 + $0xb8] sm:$0xff]
        %v569 = vld [vmem:[#allocation6 + $0xc0] sm:$0xff]
        %v570 = vld [vmem:[#allocation6 + $0xc8] sm:$0xff]
        %v571 = vld [vmem:[#allocation6 + $0xd0] sm:$0xff]
        %v572 = vld [vmem:[#allocation6 + $0xd8] sm:$0xff]
        %v573 = vld [vmem:[#allocation6 + $0xe0] sm:$0xff]
        %v574 = vld [vmem:[#allocation6 + $0xe8] sm:$0xff]
        %v575 = vld [vmem:[#allocation6 + $0xf0] sm:$0xff]
        %v576 = vld [vmem:[#allocation6 + $0xf8] sm:$0xff]
        %v577 = vld [vmem:[#allocation6 + $0x100] sm:$0xff]
        %v578 = vld [vmem:[#allocation6 + $0x108] sm:$0xff]
        %v579 = vld [vmem:[#allocation6 + $0x110] sm:$0xff]
        %v580 = vld [vmem:[#allocation6 + $0x118] sm:$0xff]
        %v581 = vld [vmem:[#allocation6 + $0x120] sm:$0xff]
        %v582 = vld [vmem:[#allocation6 + $0x128] sm:$0xff]
        %v583 = vld [vmem:[#allocation6 + $0x130] sm:$0xff]
        %v584 = vld [vmem:[#allocation6 + $0x138] sm:$0xff]
        %v585 = vld [vmem:[#allocation6 + $0x140] sm:$0xff]
        %v586 = vld [vmem:[#allocation6 + $0x148] sm:$0xff]
        %v587 = vld [vmem:[#allocation6 + $0x150] sm:$0xff]
        %v588 = vld [vmem:[#allocation6 + $0x158] sm:$0xff]
        %v589 = vld [vmem:[#allocation6 + $0x160] sm:$0xff]
        %v590 = vld [vmem:[#allocation6 + $0x168] sm:$0xff]
        %v591 = vld [vmem:[#allocation6 + $0x170] sm:$0xff]
        %v592 = vld [vmem:[#allocation6 + $0x178] sm:$0xff]
        %v593 = vld [vmem:[#allocation6 + $0x180] sm:$0xff]
        %v594 = vld [vmem:[#allocation6 + $0x188] sm:$0xff]
        %v595 = vld [vmem:[#allocation6 + $0x190] sm:$0xff]
        %v596 = vld [vmem:[#allocation6 + $0x198] sm:$0xff]
        %v597 = vld [vmem:[#allocation6 + $0x1a0] sm:$0xff]
        %v598 = vld [vmem:[#allocation6 + $0x1a8] sm:$0xff]
        %v599 = vld [vmem:[#allocation6 + $0x1b0] sm:$0xff]
        %v600 = vld [vmem:[#allocation6 + $0x1b8] sm:$0xff]
        %v601 = vld [vmem:[#allocation6 + $0x1c0] sm:$0xff]
        %v602 = vld [vmem:[#allocation6 + $0x1c8] sm:$0xff]
        %v603 = vld [vmem:[#allocation6 + $0x1d0] sm:$0xff]
        %v604 = vld [vmem:[#allocation6 + $0x1d8] sm:$0xff]
        %v605 = vld [vmem:[#allocation6 + $0x1e0] sm:$0xff]
        %v606 = vld [vmem:[#allocation6 + $0x1e8] sm:$0xff]
        %v607 = vld [vmem:[#allocation6 + $0x1f0] sm:$0xff]
        %v608 = vld [vmem:[#allocation6 + $0x1f8] sm:$0xff]
        %v609 = vld [vmem:[#allocation6 + $0x200] sm:$0xff]
        %v610 = vld [vmem:[#allocation6 + $0x208] sm:$0xff]
        %v611 = vld [vmem:[#allocation6 + $0x210] sm:$0xff]
        %v612 = vld [vmem:[#allocation6 + $0x218] sm:$0xff]
        %v613 = vld [vmem:[#allocation6 + $0x220] sm:$0xff]
        %v614 = vld [vmem:[#allocation6 + $0x228] sm:$0xff]
        %v615 = vld [vmem:[#allocation6 + $0x230] sm:$0xff]
        %v616 = vld [vmem:[#allocation6 + $0x238] sm:$0xff]
        %v617 = vld [vmem:[#allocation6 + $0x240] sm:$0xff]
        %v618 = vld [vmem:[#allocation6 + $0x248] sm:$0xff]
        %v619 = vld [vmem:[#allocation6 + $0x250] sm:$0xff]
        %v620 = vld [vmem:[#allocation6 + $0x258] sm:$0xff]
        %v621 = vld [vmem:[#allocation6 + $0x260] sm:$0xff]
        %v622 = vld [vmem:[#allocation6 + $0x268] sm:$0xff]
        %v623 = vld [vmem:[#allocation6 + $0x270] sm:$0xff]
        %v624 = vld [vmem:[#allocation6 + $0x278] sm:$0xff]
        %v625 = vld [vmem:[#allocation6 + $0x280] sm:$0xff]
        %v626 = vld [vmem:[#allocation6 + $0x288] sm:$0xff]
        %v627 = vld [vmem:[#allocation6 + $0x290] sm:$0xff]
        %v628 = vld [vmem:[#allocation6 + $0x298] sm:$0xff]
        %v629 = vld [vmem:[#allocation6 + $0x2a0] sm:$0xff]
        %v630 = vld [vmem:[#allocation6 + $0x2a8] sm:$0xff]
        %v631 = vld [vmem:[#allocation6 + $0x2b0] sm:$0xff]
        %v632 = vld [vmem:[#allocation6 + $0x2b8] sm:$0xff]
        %v633 = vld [vmem:[#allocation6 + $0x2c0] sm:$0xff]
        %v634 = vld [vmem:[#allocation6 + $0x2c8] sm:$0xff]
        %v635 = vld [vmem:[#allocation6 + $0x2d0] sm:$0xff]
        %v636 = vld [vmem:[#allocation6 + $0x2d8] sm:$0xff]
        %v637 = vld [vmem:[#allocation6 + $0x2e0] sm:$0xff]
        %v638 = vld [vmem:[#allocation6 + $0x2e8] sm:$0xff]
        %v639 = vld [vmem:[#allocation6 + $0x2f0] sm:$0xff]
        %v640 = vld [vmem:[#allocation6 + $0x2f8] sm:$0xff]
        %v641 = vld [vmem:[#allocation6 + $0x300] sm:$0xff]
        %v642 = vld [vmem:[#allocation6 + $0x308] sm:$0xff]
        %v643 = vld [vmem:[#allocation6 + $0x310] sm:$0xff]
        %v644 = vld [vmem:[#allocation6 + $0x318] sm:$0xff]
        %v645 = vld [vmem:[#allocation6 + $0x320] sm:$0xff]
        %v646 = vld [vmem:[#allocation6 + $0x328] sm:$0xff]
        %v647 = vld [vmem:[#allocation6 + $0x330] sm:$0xff]
        %v648 = vld [vmem:[#allocation6 + $0x338] sm:$0xff]
        %v649 = vld [vmem:[#allocation6 + $0x340] sm:$0xff]
        %v650 = vld [vmem:[#allocation6 + $0x348] sm:$0xff]
        %v651 = vld [vmem:[#allocation6 + $0x350] sm:$0xff]
        %v652 = vld [vmem:[#allocation6 + $0x358] sm:$0xff]
        %v653 = vld [vmem:[#allocation6 + $0x360] sm:$0xff]
        %v654 = vld [vmem:[#allocation6 + $0x368] sm:$0xff]
        %v655 = vld [vmem:[#allocation6 + $0x370] sm:$0xff]
        %v656 = vld [vmem:[#allocation6 + $0x378] sm:$0xff]
        %v657 = vld [vmem:[#allocation6 + $0x380] sm:$0xff]
        %v658 = vld [vmem:[#allocation6 + $0x388] sm:$0xff]
        %v659 = vld [vmem:[#allocation6 + $0x390] sm:$0xff]
        %v660 = vld [vmem:[#allocation6 + $0x398] sm:$0xff]
        %v661 = vld [vmem:[#allocation6 + $0x3a0] sm:$0xff]
        %v662 = vld [vmem:[#allocation6 + $0x3a8] sm:$0xff]
        %v663 = vld [vmem:[#allocation6 + $0x3b0] sm:$0xff]
        %v664 = vld [vmem:[#allocation6 + $0x3b8] sm:$0xff]
        %v666 = vsel %vm352, %v544, 0
        %668 = vmatpush.msra.mxu0 %v590
        %669 = vmatpush.msra.mxu0 %v587
        %670 = vmatpush.msra.mxu0 %v584
        %671 = vmatpush.msra.mxu0 %v581
        %672 = vmatpush.msra.mxu0 %v578
        %673 = vmatpush.msra.mxu0 %v575
        %674 = vmatpush.msra.mxu0 %v572
        %675 = vmatpush.msra.mxu0 %v569
        %676 = vmatpush.msra.mxu0 %v566
        %677 = vmatpush.msra.mxu0 %v563
        %678 = vmatpush.msra.mxu0 %v560
        %679 = vmatpush.msra.mxu0 %v557
        %680 = vmatpush.msra.mxu0 %v554
        %681 = vmatpush.msra.mxu0 %v551
        %682 = vmatpush.msra.mxu0 %v548
        %683 = vmatpush.msra.mxu0 %v545
        %684 = vmatmul.f32.gmra.mxu0 %v542
        %v685 = vpop.f32.mrf.mxu0
        %v686 = vadd.f32 0.0, %v685
        %687 = vdwg.mxu0
        %688 = vmatpush.msra.mxu0 %v638
        %689 = vmatpush.msra.mxu0 %v635
        %690 = vmatpush.msra.mxu0 %v632
        %691 = vmatpush.msra.mxu0 %v629
        %692 = vmatpush.msra.mxu0 %v626
        %693 = vmatpush.msra.mxu0 %v623
        %694 = vmatpush.msra.mxu0 %v620
        %695 = vmatpush.msra.mxu0 %v617
        %696 = vmatpush.msra.mxu0 %v614
        %697 = vmatpush.msra.mxu0 %v611
        %698 = vmatpush.msra.mxu0 %v608
        %699 = vmatpush.msra.mxu0 %v605
        %700 = vmatpush.msra.mxu0 %v602
        %701 = vmatpush.msra.mxu0 %v599
        %702 = vmatpush.msra.mxu0 %v596
        %703 = vmatpush.msra.mxu0 %v593
        %704 = vmatmul.f32.gmra.mxu0 %v543
        %v705 = vpop.f32.mrf.mxu0
        %v706 = vadd.f32 %v686, %v705
        %707 = vdwg.mxu0
        %708 = vmatpush.msra.mxu0 0.0
        %709 = vmatpush.msra.mxu0 0.0
        %710 = vmatpush.msra.mxu0 0.0
        %711 = vmatpush.msra.mxu0 0.0
        %712 = vmatpush.msra.mxu0 0.0
        %713 = vmatpush.msra.mxu0 0.0
        %714 = vmatpush.msra.mxu0 0.0
        %715 = vmatpush.msra.mxu0 0.0
        %716 = vmatpush.msra.mxu0 %v662
        %717 = vmatpush.msra.mxu0 %v659
        %718 = vmatpush.msra.mxu0 %v656
        %719 = vmatpush.msra.mxu0 %v653
        %720 = vmatpush.msra.mxu0 %v650
        %721 = vmatpush.msra.mxu0 %v647
        %722 = vmatpush.msra.mxu0 %v644
        %723 = vmatpush.msra.mxu0 %v641
        %724 = vmatmul.f32.gmra.mxu0 %v666
        %v725 = vpop.f32.mrf.mxu0
        %v726 = vadd.f32 %v706, %v725
        %727 = vdwg.mxu0
        %728 = vmatpush.msra.mxu0 %v591
        %729 = vmatpush.msra.mxu0 %v588
        %730 = vmatpush.msra.mxu0 %v585
        %731 = vmatpush.msra.mxu0 %v582
        %732 = vmatpush.msra.mxu0 %v579
        %733 = vmatpush.msra.mxu0 %v576
        %734 = vmatpush.msra.mxu0 %v573
        %735 = vmatpush.msra.mxu0 %v570
        %736 = vmatpush.msra.mxu0 %v567
        %737 = vmatpush.msra.mxu0 %v564
        %738 = vmatpush.msra.mxu0 %v561
        %739 = vmatpush.msra.mxu0 %v558
        %740 = vmatpush.msra.mxu0 %v555
        %741 = vmatpush.msra.mxu0 %v552
        %742 = vmatpush.msra.mxu0 %v549
        %743 = vmatpush.msra.mxu0 %v546
        %744 = vmatmul.f32.gmra.mxu0 %v542
        %v745 = vpop.f32.mrf.mxu0
        %v746 = vadd.f32 0.0, %v745
        %747 = vdwg.mxu0
        %748 = vmatpush.msra.mxu0 %v639
        %749 = vmatpush.msra.mxu0 %v636
        %750 = vmatpush.msra.mxu0 %v633
        %751 = vmatpush.msra.mxu0 %v630
        %752 = vmatpush.msra.mxu0 %v627
        %753 = vmatpush.msra.mxu0 %v624
        %754 = vmatpush.msra.mxu0 %v621
        %755 = vmatpush.msra.mxu0 %v618
        %756 = vmatpush.msra.mxu0 %v615
        %757 = vmatpush.msra.mxu0 %v612
        %758 = vmatpush.msra.mxu0 %v609
        %759 = vmatpush.msra.mxu0 %v606
        %760 = vmatpush.msra.mxu0 %v603
        %761 = vmatpush.msra.mxu0 %v600
        %762 = vmatpush.msra.mxu0 %v597
        %763 = vmatpush.msra.mxu0 %v594
        %764 = vmatmul.f32.gmra.mxu0 %v543
        %v765 = vpop.f32.mrf.mxu0
        %v766 = vadd.f32 %v746, %v765
        %767 = vdwg.mxu0
        %768 = vmatpush.msra.mxu0 0.0
        %769 = vmatpush.msra.mxu0 0.0
        %770 = vmatpush.msra.mxu0 0.0
        %771 = vmatpush.msra.mxu0 0.0
        %772 = vmatpush.msra.mxu0 0.0
        %773 = vmatpush.msra.mxu0 0.0
        %774 = vmatpush.msra.mxu0 0.0
        %775 = vmatpush.msra.mxu0 0.0
        %776 = vmatpush.msra.mxu0 %v663
        %777 = vmatpush.msra.mxu0 %v660
        %778 = vmatpush.msra.mxu0 %v657
        %779 = vmatpush.msra.mxu0 %v654
        %780 = vmatpush.msra.mxu0 %v651
        %781 = vmatpush.msra.mxu0 %v648
        %782 = vmatpush.msra.mxu0 %v645
        %783 = vmatpush.msra.mxu0 %v642
        %784 = vmatmul.f32.gmra.mxu0 %v666
        %v785 = vpop.f32.mrf.mxu0
        %v786 = vadd.f32 %v766, %v785
        %787 = vdwg.mxu0
        %788 = vmatpush.msra.mxu0 %v592
        %789 = vmatpush.msra.mxu0 %v589
        %790 = vmatpush.msra.mxu0 %v586
        %791 = vmatpush.msra.mxu0 %v583
        %792 = vmatpush.msra.mxu0 %v580
        %793 = vmatpush.msra.mxu0 %v577
        %794 = vmatpush.msra.mxu0 %v574
        %795 = vmatpush.msra.mxu0 %v571
        %796 = vmatpush.msra.mxu0 %v568
        %797 = vmatpush.msra.mxu0 %v565
        %798 = vmatpush.msra.mxu0 %v562
        %799 = vmatpush.msra.mxu0 %v559
        %800 = vmatpush.msra.mxu0 %v556
        %801 = vmatpush.msra.mxu0 %v553
        %802 = vmatpush.msra.mxu0 %v550
        %803 = vmatpush.msra.mxu0 %v547
        %804 = vmatmul.f32.gmra.mxu0 %v542
        %v805 = vpop.f32.mrf.mxu0
        %v806 = vadd.f32 0.0, %v805
        %807 = vdwg.mxu0
        %808 = vmatpush.msra.mxu0 %v640
        %809 = vmatpush.msra.mxu0 %v637
        %810 = vmatpush.msra.mxu0 %v634
        %811 = vmatpush.msra.mxu0 %v631
        %812 = vmatpush.msra.mxu0 %v628
        %813 = vmatpush.msra.mxu0 %v625
        %814 = vmatpush.msra.mxu0 %v622
        %815 = vmatpush.msra.mxu0 %v619
        %816 = vmatpush.msra.mxu0 %v616
        %817 = vmatpush.msra.mxu0 %v613
        %818 = vmatpush.msra.mxu0 %v610
        %819 = vmatpush.msra.mxu0 %v607
        %820 = vmatpush.msra.mxu0 %v604
        %821 = vmatpush.msra.mxu0 %v601
        %822 = vmatpush.msra.mxu0 %v598
        %823 = vmatpush.msra.mxu0 %v595
        %824 = vmatmul.f32.gmra.mxu0 %v543
        %v825 = vpop.f32.mrf.mxu0
        %v826 = vadd.f32 %v806, %v825
        %827 = vdwg.mxu0
        %828 = vmatpush.msra.mxu0 0.0
        %829 = vmatpush.msra.mxu0 0.0
        %830 = vmatpush.msra.mxu0 0.0
        %831 = vmatpush.msra.mxu0 0.0
        %832 = vmatpush.msra.mxu0 0.0
        %833 = vmatpush.msra.mxu0 0.0
        %834 = vmatpush.msra.mxu0 0.0
        %835 = vmatpush.msra.mxu0 0.0
        %836 = vmatpush.msra.mxu0 %v664
        %837 = vmatpush.msra.mxu0 %v661
        %838 = vmatpush.msra.mxu0 %v658
        %839 = vmatpush.msra.mxu0 %v655
        %840 = vmatpush.msra.mxu0 %v652
        %841 = vmatpush.msra.mxu0 %v649
        %842 = vmatpush.msra.mxu0 %v646
        %843 = vmatpush.msra.mxu0 %v643
        %844 = vmatmul.f32.gmra.mxu0 %v666
        %v845 = vpop.f32.mrf.mxu0
        %v846 = vadd.f32 %v826, %v845
        %847 = vdwg.mxu0
        %v851 = vrot.slane %v726, 7
        %v852 = vrot.slane %v786, 7
        %v853 = vrot.slane %v846, 7
        %v857 = vadd.f32 %v539, %v851
        %v858 = vadd.f32 %v540, %v852
        %v859 = vadd.f32 %v541, %v853
        %860 = vst [vmem:[#allocation2] sm:$0xfe] %v857
        %861 = vst [vmem:[#allocation2 + $0x8] sm:$0xfe] %v858
        %vm862 = vcmask 523265
        %863 = vst.msk [vmem:[#allocation2 + $0x10] sm:$0xfe] %vm862, %v859
        %v864 = vld [vmem:[#allocation2] sm:$0x7f]
        %v865 = vld [vmem:[#allocation2 + $0x8] sm:$0x7f]
        %v866 = vld [vmem:[#allocation2 + $0x10] sm:$0x7f]
        %v867 = vld [vmem:[%s186] sm:$0xfe]
        %v868 = vld [vmem:[%s186 + $0x8] sm:$0xfe]
        %v869 = vld [vmem:[%s186 + $0x10] sm:$0xfe]
        %s870 = scalar_lea.vmem [#allocation6], 1920
        %v871 = vld [vmem:[%s870] sm:$0xff]
        %v872 = vld [vmem:[%s870 + $0x8] sm:$0xff]
        %v873 = vld [vmem:[%s870 + $0x10] sm:$0xff]
        %v874 = vld [vmem:[%s870 + $0x18] sm:$0xff]
        %v875 = vld [vmem:[%s870 + $0x20] sm:$0xff]
        %v876 = vld [vmem:[%s870 + $0x28] sm:$0xff]
        %v877 = vld [vmem:[%s870 + $0x30] sm:$0xff]
        %v878 = vld [vmem:[%s870 + $0x38] sm:$0xff]
        %v879 = vld [vmem:[%s870 + $0x40] sm:$0xff]
        %v880 = vld [vmem:[%s870 + $0x48] sm:$0xff]
        %v881 = vld [vmem:[%s870 + $0x50] sm:$0xff]
        %v882 = vld [vmem:[%s870 + $0x58] sm:$0xff]
        %v883 = vld [vmem:[%s870 + $0x60] sm:$0xff]
        %v884 = vld [vmem:[%s870 + $0x68] sm:$0xff]
        %v885 = vld [vmem:[%s870 + $0x70] sm:$0xff]
        %v886 = vld [vmem:[%s870 + $0x78] sm:$0xff]
        %v887 = vld [vmem:[%s870 + $0x80] sm:$0xff]
        %v888 = vld [vmem:[%s870 + $0x88] sm:$0xff]
        %v889 = vld [vmem:[%s870 + $0x90] sm:$0xff]
        %v890 = vld [vmem:[%s870 + $0x98] sm:$0xff]
        %v891 = vld [vmem:[%s870 + $0xa0] sm:$0xff]
        %v892 = vld [vmem:[%s870 + $0xa8] sm:$0xff]
        %v893 = vld [vmem:[%s870 + $0xb0] sm:$0xff]
        %v894 = vld [vmem:[%s870 + $0xb8] sm:$0xff]
        %v895 = vld [vmem:[%s870 + $0xc0] sm:$0xff]
        %v896 = vld [vmem:[%s870 + $0xc8] sm:$0xff]
        %v897 = vld [vmem:[%s870 + $0xd0] sm:$0xff]
        %v898 = vld [vmem:[%s870 + $0xd8] sm:$0xff]
        %v899 = vld [vmem:[%s870 + $0xe0] sm:$0xff]
        %v900 = vld [vmem:[%s870 + $0xe8] sm:$0xff]
        %v901 = vld [vmem:[%s870 + $0xf0] sm:$0xff]
        %v902 = vld [vmem:[%s870 + $0xf8] sm:$0xff]
        %v903 = vld [vmem:[%s870 + $0x100] sm:$0xff]
        %v904 = vld [vmem:[%s870 + $0x108] sm:$0xff]
        %v905 = vld [vmem:[%s870 + $0x110] sm:$0xff]
        %v906 = vld [vmem:[%s870 + $0x118] sm:$0xff]
        %v907 = vld [vmem:[%s870 + $0x120] sm:$0xff]
        %v908 = vld [vmem:[%s870 + $0x128] sm:$0xff]
        %v909 = vld [vmem:[%s870 + $0x130] sm:$0xff]
        %v910 = vld [vmem:[%s870 + $0x138] sm:$0xff]
        %v911 = vld [vmem:[%s870 + $0x140] sm:$0xff]
        %v912 = vld [vmem:[%s870 + $0x148] sm:$0xff]
        %v913 = vld [vmem:[%s870 + $0x150] sm:$0xff]
        %v914 = vld [vmem:[%s870 + $0x158] sm:$0xff]
        %v915 = vld [vmem:[%s870 + $0x160] sm:$0xff]
        %v916 = vld [vmem:[%s870 + $0x168] sm:$0xff]
        %v917 = vld [vmem:[%s870 + $0x170] sm:$0xff]
        %v918 = vld [vmem:[%s870 + $0x178] sm:$0xff]
        %v919 = vld [vmem:[%s870 + $0x180] sm:$0xff]
        %v920 = vld [vmem:[%s870 + $0x188] sm:$0xff]
        %v921 = vld [vmem:[%s870 + $0x190] sm:$0xff]
        %v922 = vld [vmem:[%s870 + $0x198] sm:$0xff]
        %v923 = vld [vmem:[%s870 + $0x1a0] sm:$0xff]
        %v924 = vld [vmem:[%s870 + $0x1a8] sm:$0xff]
        %v925 = vld [vmem:[%s870 + $0x1b0] sm:$0xff]
        %v926 = vld [vmem:[%s870 + $0x1b8] sm:$0xff]
        %v927 = vld [vmem:[%s870 + $0x1c0] sm:$0xff]
        %v928 = vld [vmem:[%s870 + $0x1c8] sm:$0xff]
        %v929 = vld [vmem:[%s870 + $0x1d0] sm:$0xff]
        %v930 = vld [vmem:[%s870 + $0x1d8] sm:$0xff]
        %v931 = vld [vmem:[%s870 + $0x1e0] sm:$0xff]
        %v932 = vld [vmem:[%s870 + $0x1e8] sm:$0xff]
        %v933 = vld [vmem:[%s870 + $0x1f0] sm:$0xff]
        %v934 = vld [vmem:[%s870 + $0x1f8] sm:$0xff]
        %v935 = vld [vmem:[%s870 + $0x200] sm:$0xff]
        %v936 = vld [vmem:[%s870 + $0x208] sm:$0xff]
        %v937 = vld [vmem:[%s870 + $0x210] sm:$0xff]
        %v938 = vld [vmem:[%s870 + $0x218] sm:$0xff]
        %v939 = vld [vmem:[%s870 + $0x220] sm:$0xff]
        %v940 = vld [vmem:[%s870 + $0x228] sm:$0xff]
        %v941 = vld [vmem:[%s870 + $0x230] sm:$0xff]
        %v942 = vld [vmem:[%s870 + $0x238] sm:$0xff]
        %v943 = vld [vmem:[%s870 + $0x240] sm:$0xff]
        %v944 = vld [vmem:[%s870 + $0x248] sm:$0xff]
        %v945 = vld [vmem:[%s870 + $0x250] sm:$0xff]
        %v946 = vld [vmem:[%s870 + $0x258] sm:$0xff]
        %v947 = vld [vmem:[%s870 + $0x260] sm:$0xff]
        %v948 = vld [vmem:[%s870 + $0x268] sm:$0xff]
        %v949 = vld [vmem:[%s870 + $0x270] sm:$0xff]
        %v950 = vld [vmem:[%s870 + $0x278] sm:$0xff]
        %v951 = vld [vmem:[%s870 + $0x280] sm:$0xff]
        %v952 = vld [vmem:[%s870 + $0x288] sm:$0xff]
        %v953 = vld [vmem:[%s870 + $0x290] sm:$0xff]
        %v954 = vld [vmem:[%s870 + $0x298] sm:$0xff]
        %v955 = vld [vmem:[%s870 + $0x2a0] sm:$0xff]
        %v956 = vld [vmem:[%s870 + $0x2a8] sm:$0xff]
        %v957 = vld [vmem:[%s870 + $0x2b0] sm:$0xff]
        %v958 = vld [vmem:[%s870 + $0x2b8] sm:$0xff]
        %v959 = vld [vmem:[%s870 + $0x2c0] sm:$0xff]
        %v960 = vld [vmem:[%s870 + $0x2c8] sm:$0xff]
        %v961 = vld [vmem:[%s870 + $0x2d0] sm:$0xff]
        %v962 = vld [vmem:[%s870 + $0x2d8] sm:$0xff]
        %v963 = vld [vmem:[%s870 + $0x2e0] sm:$0xff]
        %v964 = vld [vmem:[%s870 + $0x2e8] sm:$0xff]
        %v965 = vld [vmem:[%s870 + $0x2f0] sm:$0xff]
        %v966 = vld [vmem:[%s870 + $0x2f8] sm:$0xff]
        %v967 = vld [vmem:[%s870 + $0x300] sm:$0xff]
        %v968 = vld [vmem:[%s870 + $0x308] sm:$0xff]
        %v969 = vld [vmem:[%s870 + $0x310] sm:$0xff]
        %v970 = vld [vmem:[%s870 + $0x318] sm:$0xff]
        %v971 = vld [vmem:[%s870 + $0x320] sm:$0xff]
        %v972 = vld [vmem:[%s870 + $0x328] sm:$0xff]
        %v973 = vld [vmem:[%s870 + $0x330] sm:$0xff]
        %v974 = vld [vmem:[%s870 + $0x338] sm:$0xff]
        %v975 = vld [vmem:[%s870 + $0x340] sm:$0xff]
        %v976 = vld [vmem:[%s870 + $0x348] sm:$0xff]
        %v977 = vld [vmem:[%s870 + $0x350] sm:$0xff]
        %v978 = vld [vmem:[%s870 + $0x358] sm:$0xff]
        %v979 = vld [vmem:[%s870 + $0x360] sm:$0xff]
        %v980 = vld [vmem:[%s870 + $0x368] sm:$0xff]
        %v981 = vld [vmem:[%s870 + $0x370] sm:$0xff]
        %v982 = vld [vmem:[%s870 + $0x378] sm:$0xff]
        %v983 = vld [vmem:[%s870 + $0x380] sm:$0xff]
        %v984 = vld [vmem:[%s870 + $0x388] sm:$0xff]
        %v985 = vld [vmem:[%s870 + $0x390] sm:$0xff]
        %v986 = vld [vmem:[%s870 + $0x398] sm:$0xff]
        %v987 = vld [vmem:[%s870 + $0x3a0] sm:$0xff]
        %v988 = vld [vmem:[%s870 + $0x3a8] sm:$0xff]
        %v989 = vld [vmem:[%s870 + $0x3b0] sm:$0xff]
        %v990 = vld [vmem:[%s870 + $0x3b8] sm:$0xff]
        %v994 = vrot.slane %v867, 1
        %v995 = vrot.slane %v868, 1
        %v996 = vrot.slane %v869, 1
        %v999 = vsel %vm352, %v996, 0
        %1001 = vmatpush.msra.mxu0 %v916
        %1002 = vmatpush.msra.mxu0 %v913
        %1003 = vmatpush.msra.mxu0 %v910
        %1004 = vmatpush.msra.mxu0 %v907
        %1005 = vmatpush.msra.mxu0 %v904
        %1006 = vmatpush.msra.mxu0 %v901
        %1007 = vmatpush.msra.mxu0 %v898
        %1008 = vmatpush.msra.mxu0 %v895
        %1009 = vmatpush.msra.mxu0 %v892
        %1010 = vmatpush.msra.mxu0 %v889
        %1011 = vmatpush.msra.mxu0 %v886
        %1012 = vmatpush.msra.mxu0 %v883
        %1013 = vmatpush.msra.mxu0 %v880
        %1014 = vmatpush.msra.mxu0 %v877
        %1015 = vmatpush.msra.mxu0 %v874
        %1016 = vmatpush.msra.mxu0 %v871
        %1017 = vmatmul.f32.gmra.mxu0 %v994
        %v1018 = vpop.f32.mrf.mxu0
        %v1019 = vadd.f32 0.0, %v1018
        %1020 = vdwg.mxu0
        %1021 = vmatpush.msra.mxu0 %v964
        %1022 = vmatpush.msra.mxu0 %v961
        %1023 = vmatpush.msra.mxu0 %v958
        %1024 = vmatpush.msra.mxu0 %v955
        %1025 = vmatpush.msra.mxu0 %v952
        %1026 = vmatpush.msra.mxu0 %v949
        %1027 = vmatpush.msra.mxu0 %v946
        %1028 = vmatpush.msra.mxu0 %v943
        %1029 = vmatpush.msra.mxu0 %v940
        %1030 = vmatpush.msra.mxu0 %v937
        %1031 = vmatpush.msra.mxu0 %v934
        %1032 = vmatpush.msra.mxu0 %v931
        %1033 = vmatpush.msra.mxu0 %v928
        %1034 = vmatpush.msra.mxu0 %v925
        %1035 = vmatpush.msra.mxu0 %v922
        %1036 = vmatpush.msra.mxu0 %v919
        %1037 = vmatmul.f32.gmra.mxu0 %v995
        %v1038 = vpop.f32.mrf.mxu0
        %v1039 = vadd.f32 %v1019, %v1038
        %1040 = vdwg.mxu0
        %1041 = vmatpush.msra.mxu0 0.0
        %1042 = vmatpush.msra.mxu0 0.0
        %1043 = vmatpush.msra.mxu0 0.0
        %1044 = vmatpush.msra.mxu0 0.0
        %1045 = vmatpush.msra.mxu0 0.0
        %1046 = vmatpush.msra.mxu0 0.0
        %1047 = vmatpush.msra.mxu0 0.0
        %1048 = vmatpush.msra.mxu0 0.0
        %1049 = vmatpush.msra.mxu0 %v988
        %1050 = vmatpush.msra.mxu0 %v985
        %1051 = vmatpush.msra.mxu0 %v982
        %1052 = vmatpush.msra.mxu0 %v979
        %1053 = vmatpush.msra.mxu0 %v976
        %1054 = vmatpush.msra.mxu0 %v973
        %1055 = vmatpush.msra.mxu0 %v970
        %1056 = vmatpush.msra.mxu0 %v967
        %1057 = vmatmul.f32.gmra.mxu0 %v999
        %v1058 = vpop.f32.mrf.mxu0
        %v1059 = vadd.f32 %v1039, %v1058
        %1060 = vdwg.mxu0
        %1061 = vmatpush.msra.mxu0 %v917
        %1062 = vmatpush.msra.mxu0 %v914
        %1063 = vmatpush.msra.mxu0 %v911
        %1064 = vmatpush.msra.mxu0 %v908
        %1065 = vmatpush.msra.mxu0 %v905
        %1066 = vmatpush.msra.mxu0 %v902
        %1067 = vmatpush.msra.mxu0 %v899
        %1068 = vmatpush.msra.mxu0 %v896
        %1069 = vmatpush.msra.mxu0 %v893
        %1070 = vmatpush.msra.mxu0 %v890
        %1071 = vmatpush.msra.mxu0 %v887
        %1072 = vmatpush.msra.mxu0 %v884
        %1073 = vmatpush.msra.mxu0 %v881
        %1074 = vmatpush.msra.mxu0 %v878
        %1075 = vmatpush.msra.mxu0 %v875
        %1076 = vmatpush.msra.mxu0 %v872
        %1077 = vmatmul.f32.gmra.mxu0 %v994
        %v1078 = vpop.f32.mrf.mxu0
        %v1079 = vadd.f32 0.0, %v1078
        %1080 = vdwg.mxu0
        %1081 = vmatpush.msra.mxu0 %v965
        %1082 = vmatpush.msra.mxu0 %v962
        %1083 = vmatpush.msra.mxu0 %v959
        %1084 = vmatpush.msra.mxu0 %v956
        %1085 = vmatpush.msra.mxu0 %v953
        %1086 = vmatpush.msra.mxu0 %v950
        %1087 = vmatpush.msra.mxu0 %v947
        %1088 = vmatpush.msra.mxu0 %v944
        %1089 = vmatpush.msra.mxu0 %v941
        %1090 = vmatpush.msra.mxu0 %v938
        %1091 = vmatpush.msra.mxu0 %v935
        %1092 = vmatpush.msra.mxu0 %v932
        %1093 = vmatpush.msra.mxu0 %v929
        %1094 = vmatpush.msra.mxu0 %v926
        %1095 = vmatpush.msra.mxu0 %v923
        %1096 = vmatpush.msra.mxu0 %v920
        %1097 = vmatmul.f32.gmra.mxu0 %v995
        %v1098 = vpop.f32.mrf.mxu0
        %v1099 = vadd.f32 %v1079, %v1098
        %1100 = vdwg.mxu0
        %1101 = vmatpush.msra.mxu0 0.0
        %1102 = vmatpush.msra.mxu0 0.0
        %1103 = vmatpush.msra.mxu0 0.0
        %1104 = vmatpush.msra.mxu0 0.0
        %1105 = vmatpush.msra.mxu0 0.0
        %1106 = vmatpush.msra.mxu0 0.0
        %1107 = vmatpush.msra.mxu0 0.0
        %1108 = vmatpush.msra.mxu0 0.0
        %1109 = vmatpush.msra.mxu0 %v989
        %1110 = vmatpush.msra.mxu0 %v986
        %1111 = vmatpush.msra.mxu0 %v983
        %1112 = vmatpush.msra.mxu0 %v980
        %1113 = vmatpush.msra.mxu0 %v977
        %1114 = vmatpush.msra.mxu0 %v974
        %1115 = vmatpush.msra.mxu0 %v971
        %1116 = vmatpush.msra.mxu0 %v968
        %1117 = vmatmul.f32.gmra.mxu0 %v999
        %v1118 = vpop.f32.mrf.mxu0
        %v1119 = vadd.f32 %v1099, %v1118
        %1120 = vdwg.mxu0
        %1121 = vmatpush.msra.mxu0 %v918
        %1122 = vmatpush.msra.mxu0 %v915
        %1123 = vmatpush.msra.mxu0 %v912
        %1124 = vmatpush.msra.mxu0 %v909
        %1125 = vmatpush.msra.mxu0 %v906
        %1126 = vmatpush.msra.mxu0 %v903
        %1127 = vmatpush.msra.mxu0 %v900
        %1128 = vmatpush.msra.mxu0 %v897
        %1129 = vmatpush.msra.mxu0 %v894
        %1130 = vmatpush.msra.mxu0 %v891
        %1131 = vmatpush.msra.mxu0 %v888
        %1132 = vmatpush.msra.mxu0 %v885
        %1133 = vmatpush.msra.mxu0 %v882
        %1134 = vmatpush.msra.mxu0 %v879
        %1135 = vmatpush.msra.mxu0 %v876
        %1136 = vmatpush.msra.mxu0 %v873
        %1137 = vmatmul.f32.gmra.mxu0 %v994
        %v1138 = vpop.f32.mrf.mxu0
        %v1139 = vadd.f32 0.0, %v1138
        %1140 = vdwg.mxu0
        %1141 = vmatpush.msra.mxu0 %v966
        %1142 = vmatpush.msra.mxu0 %v963
        %1143 = vmatpush.msra.mxu0 %v960
        %1144 = vmatpush.msra.mxu0 %v957
        %1145 = vmatpush.msra.mxu0 %v954
        %1146 = vmatpush.msra.mxu0 %v951
        %1147 = vmatpush.msra.mxu0 %v948
        %1148 = vmatpush.msra.mxu0 %v945
        %1149 = vmatpush.msra.mxu0 %v942
        %1150 = vmatpush.msra.mxu0 %v939
        %1151 = vmatpush.msra.mxu0 %v936
        %1152 = vmatpush.msra.mxu0 %v933
        %1153 = vmatpush.msra.mxu0 %v930
        %1154 = vmatpush.msra.mxu0 %v927
        %1155 = vmatpush.msra.mxu0 %v924
        %1156 = vmatpush.msra.mxu0 %v921
        %1157 = vmatmul.f32.gmra.mxu0 %v995
        %v1158 = vpop.f32.mrf.mxu0
        %v1159 = vadd.f32 %v1139, %v1158
        %1160 = vdwg.mxu0
        %1161 = vmatpush.msra.mxu0 0.0
        %1162 = vmatpush.msra.mxu0 0.0
        %1163 = vmatpush.msra.mxu0 0.0
        %1164 = vmatpush.msra.mxu0 0.0
        %1165 = vmatpush.msra.mxu0 0.0
        %1166 = vmatpush.msra.mxu0 0.0
        %1167 = vmatpush.msra.mxu0 0.0
        %1168 = vmatpush.msra.mxu0 0.0
        %1169 = vmatpush.msra.mxu0 %v990
        %1170 = vmatpush.msra.mxu0 %v987
        %1171 = vmatpush.msra.mxu0 %v984
        %1172 = vmatpush.msra.mxu0 %v981
        %1173 = vmatpush.msra.mxu0 %v978
        %1174 = vmatpush.msra.mxu0 %v975
        %1175 = vmatpush.msra.mxu0 %v972
        %1176 = vmatpush.msra.mxu0 %v969
        %1177 = vmatmul.f32.gmra.mxu0 %v999
        %v1178 = vpop.f32.mrf.mxu0
        %v1179 = vadd.f32 %v1159, %v1178
        %1180 = vdwg.mxu0
        %v1181 = vadd.f32 %v864, %v1059
        %v1182 = vadd.f32 %v865, %v1119
        %v1183 = vadd.f32 %v866, %v1179
        %1184 = vst [vmem:[#allocation2] sm:$0x7f] %v1181
        %1185 = vst [vmem:[#allocation2 + $0x8] sm:$0x7f] %v1182
        %vm1186 = vcmask 522240
        %1187 = vst.msk [vmem:[#allocation2 + $0x10] sm:$0x7f] %vm1186, %v1183
        %v1188 = vld [vmem:[#allocation2] sm:$0xff]
        %v1189 = vld [vmem:[#allocation2 + $0x8] sm:$0xff]
        %v1190 = vld [vmem:[#allocation2 + $0x10] sm:$0xff]
        %1191 = vst [vmem:[%s219] sm:$0xff] %v1188
        %1192 = vst [vmem:[%s219 + $0x8] sm:$0xff] %v1189
        %1193 = vst.msk [vmem:[%s219 + $0x10] sm:$0xff] %vm352, %v1190
        %s1194 = sand.u32 %s97, 1
        %s1195 = scalar_lea.sflag [#allocation5], %s1194
        %s1196 = sand.u32 %s97, 1
        %s1197 = smul.addr %s1196, 24
        %s1198 = scalar_lea.vmem [#allocation9], %s1197
        // Predicated region
        $region45: #{tpu_custom_call.1} parent=31 // pred_check
          %p1199 = pneg %p107
        $region46: #{tpu_custom_call.1} parent=31 // pred_check_branch
          %1201 = sbr.rel (%p1199) target = $region48
        $region47: #{tpu_custom_call.1} parent=31 // pred_region
          %1203 = vsyncadd %s1195, 0
          %s1204 = smul.addr %s21, 3
          %s1205 = smul.addr %s1204, 8
          %s1206 = scalar_lea.hbm %s3, %s1205
          %s1208 = sshll.u32 %s1198, 4
          %s1209 = int_to_ptr.vmem [resolvable:$true] %s1208
          %s1210 = sshll.u32 %s1206, 4
          %s1211 = int_to_ptr.hbm [resolvable:$true] %s1210
          %1213 = dma.vmem_to_hbm [thread:$0]  %s1209, 384, %s1211, %s1195
        $region48: #{tpu_custom_call.1} parent=31 // pred_fallthru
          _
      $region32: #{tpu_custom_call.1} parent=5 // pred_fallthru
        _
      %p1214 = scmp.le.s32.totalorder 2, %s16
      // Predicated region
      $region49: #{tpu_custom_call.1} parent=5 // pred_check
        %p1215 = pneg %p1214
      $region50: #{tpu_custom_call.1} parent=5 // pred_check_branch
        %1217 = sbr.rel (%p1215) target = $region52
      $region51: #{tpu_custom_call.1} parent=5 // pred_region
        %s1218 = ssub.s32 %s16, 2
        // Predicated region
        $region53: #{tpu_custom_call.1} parent=51 // pred_check
          %p1219 = pneg %p113
        $region54: #{tpu_custom_call.1} parent=51 // pred_check_branch
          %1221 = sbr.rel (%p1219) target = $region56
        $region55: #{tpu_custom_call.1} parent=51 // pred_region
          %s1222 = sand.u32 %s98, 1
          %s1223 = scalar_lea.sflag [#allocation5], %s1222
          %s1224 = sand.u32 %s98, 1
          %s1225 = smul.addr %s1224, 24
          %s1226 = scalar_lea.vmem [#allocation9], %s1225
          %1228 = dma.done %s1223, 384
        $region56: #{tpu_custom_call.1} parent=51 // pred_fallthru
          _
      $region52: #{tpu_custom_call.1} parent=5 // pred_fallthru
        _
    $region6: #{tpu_custom_call.1} parent=1 // loop_footer
      %s20 = sadd.s32 1, %s16
    $region7: #{tpu_custom_call.1} parent=1 // loop_footer_branch
      %15 = sbr.rel target = $region3
    $region8: #{tpu_custom_call.1} parent=1 // loop_exit
      _
    %1229 = vsyncpa [#allocation4], 1
    %s1230 = scalar_lea.sflag [#allocation4], 1
    %1231 = vsyncpa %s1230, 1
    %1232 = vsyncpa [#allocation7], 1
    %1233 = vsyncpa [#allocation5], 1
    %s1234 = scalar_lea.sflag [#allocation5], 1
    %1235 = vsyncpa %s1234, 1

</llo_original>
